<compile_context>
chip_gen: v7x
topology: tpu7x:2x2x1
jax: 0.10.0
libtpu: 0.0.40
codegen_flags: <defaults>
</compile_context>

<pallas_src>
import jax
import jax.numpy as jnp
from jax import lax
from jax.experimental import pallas as pl
from jax.experimental.pallas import tpu as pltpu


def _round_up(a, b):
    return ((a + b - 1) // b) * b


def _largest_dividing_tile(dim_padded, tile_max, align):
    """Largest multiple of `align` <= tile_max that divides dim_padded.

    `dim_padded` must already be a multiple of `align`."""
    if dim_padded <= tile_max:
        return dim_padded
    q = dim_padded // align
    for cand in range(tile_max // align, 0, -1):
        if q % cand == 0:
            return cand * align
    return align


def _vmem_cap_bytes():
    # Generation-aware cap: ~80% of physical VMEM per TensorCore
    # (v5e/v6e: ~102 of 128 MiB, v7x: ~51 of 64 MiB), leaving headroom for
    # compiler-internal scratch.
    try:
        cap = int(pltpu.get_tpu_info().vmem_capacity_bytes)
    except Exception:
        cap = 128 * 1024 * 1024
    return (cap * 4) // 5


def _make_linear_kernel(has_bias, single_k_step):
    """Kernel computing o = x @ w.T (+ bias), with w kept in (N, K) layout."""

    def _dot(x_ref, w_ref):
        # Contract the last dims of both operands: (tm, tk) x (tn, tk) -> (tm, tn).
        # Consuming the (N, K) weight directly avoids a per-call HBM transpose.
        return lax.dot_general(
            x_ref[...], w_ref[...],
            dimension_numbers=(((1,), (1,)), ((), ())),
            preferred_element_type=jnp.float32)

    if single_k_step:
        def kernel(*refs):
            if has_bias:
                x_ref, w_ref, b_ref, o_ref = refs
            else:
                x_ref, w_ref, o_ref = refs
            acc = _dot(x_ref, w_ref)
            if has_bias:
                acc = acc + b_ref[...].astype(jnp.float32)
            o_ref[...] = acc.astype(o_ref.dtype)
        return kernel

    def kernel(*refs):
        if has_bias:
            x_ref, w_ref, b_ref, o_ref, acc_ref = refs
        else:
            x_ref, w_ref, o_ref, acc_ref = refs
        k = pl.program_id(2)
        prod = _dot(x_ref, w_ref)

        # Direct store on the first K step (no zero-init pass), accumulate after.
        @pl.when(k == 0)
        def _():
            acc_ref[...] = prod

        @pl.when(k > 0)
        def _():
            acc_ref[...] += prod

        @pl.when(k == pl.num_programs(2) - 1)
        def _():
            out = acc_ref[...]
            if has_bias:
                out = out + b_ref[...].astype(jnp.float32)
            o_ref[...] = out.astype(o_ref.dtype)

    return kernel


def quant_linear_forward(x, weight, bias=None, *, tm_max=512, tn_max=512, tk_max=1024):
    """x: (..., in_features); weight: (out_features, in_features); bias: (out_features,) or None.

    Returns x @ weight.T + bias with the same leading dims and dtype as x.
    """
    *lead, K = x.shape
    N, K_w = weight.shape
    assert K_w == K, "weight.in_features must match x's last dim"

    M = 1
    for d in lead:
        M *= d
    out_dtype = x.dtype

    # ---- tile selection -----------------------------------------------------
    # Lane dims (K of x / weight, N of output) are 128-aligned. Pick tn / tk that
    # exactly divide the padded extents so the big weight / activation tensors are
    # not padded (a full HBM read+write) unless N / K themselves are unaligned.
    Kp = _round_up(K, 128)
    Np = _round_up(N, 128)
    tk = _largest_dividing_tile(Kp, tk_max, 128)
    tn = _largest_dividing_tile(Np, tn_max, 128)

    # Sublane packing for the M dimension (bf16 packs 16 rows/vreg, int8 packs 32).
    pack_m = {1: 32, 2: 16}.get(jnp.dtype(x.dtype).itemsize, 8)
    if M <= tm_max:
        # Small-M (decode / inference): whole M in one block -> weight panel is
        # streamed from HBM exactly once.
        tm = _round_up(M, pack_m)
        Mp = tm
    else:
        Mq = _round_up(M, pack_m)
        cand = _largest_dividing_tile(Mq, tm_max, pack_m)
        if cand >= 256:
            tm, Mp = cand, Mq               # no M padding needed
        else:
            tm = tm_max                     # pad the M tail rather than use a tiny tile
            Mp = _round_up(M, tm)

    # ---- operand padding (tails only) ----------------------------------------
    x2d = x.reshape(M, K)
    if (Mp, Kp) != (M, K):
        x2d = jnp.pad(x2d, ((0, Mp - M), (0, Kp - K)))
    w2d = weight                            # native (N, K) layout, no transpose
    if (Np, Kp) != (N, K):
        w2d = jnp.pad(w2d, ((0, Np - N), (0, Kp - K)))
    has_bias = bias is not None
    if has_bias:
        b2d = bias.reshape(1, N)
        if Np != N:
            b2d = jnp.pad(b2d, ((0, 0), (0, Np - N)))

    gm, gn, gk = Mp // tm, Np // tn, Kp // tk
    single_k = gk == 1

    # Put the larger parallel axis first so v7x megacore has something to split
    # even when gm == 1 (small M). K stays last (sequential reduction axis).
    if gn > gm:
        grid = (gn, gm, gk)
        x_map = lambda j, i, k: (i, k)
        w_map = lambda j, i, k: (j, k)
        b_map = lambda j, i, k: (0, j)
        o_map = lambda j, i, k: (i, j)
    else:
        grid = (gm, gn, gk)
        x_map = lambda i, j, k: (i, k)
        w_map = lambda i, j, k: (j, k)
        b_map = lambda i, j, k: (0, j)
        o_map = lambda i, j, k: (i, j)

    in_specs = [
        pl.BlockSpec((tm, tk), x_map),      # activations (M, K)
        # TODO(synk): sweep pipeline_mode=pl.Buffered(3) on this weight stream for
        #             the v7x mem-bound (gm == 1) regime.
        pl.BlockSpec((tn, tk), w_map),      # weight in native (N, K) layout
    ]
    operands = [x2d, w2d]
    if has_bias:
        in_specs.append(pl.BlockSpec((1, tn), b_map))
        operands.append(b2d)

    scratch_shapes = [] if single_k else [pltpu.VMEM((tm, tn), jnp.float32)]

    # ---- VMEM budget (double-buffered blocks + accumulator + headroom) -------
    x_b = jnp.dtype(x2d.dtype).itemsize
    w_b = jnp.dtype(w2d.dtype).itemsize
    o_b = jnp.dtype(out_dtype).itemsize
    block_bytes = 2 * tm * tk * x_b + 2 * tn * tk * w_b + 2 * tm * tn * o_b
    if has_bias:
        block_bytes += 2 * tn * jnp.dtype(b2d.dtype).itemsize
    if not single_k:
        block_bytes += tm * tn * 4
    vmem_limit = min(_vmem_cap_bytes(),
                     max((3 * block_bytes) // 2, 32 * 1024 * 1024))

    kernel = _make_linear_kernel(has_bias, single_k)

    out2d = pl.pallas_call(
        kernel,
        out_shape=jax.ShapeDtypeStruct((Mp, Np), out_dtype),
        grid_spec=pltpu.PrefetchScalarGridSpec(
            num_scalar_prefetch=0,
            grid=grid,
            in_specs=in_specs,
            out_specs=pl.BlockSpec((tm, tn), o_map),
            scratch_shapes=scratch_shapes,
        ),
        compiler_params=pltpu.CompilerParams(
            dimension_semantics=("parallel", "parallel", "arbitrary"),
            vmem_limit_bytes=vmem_limit,
        ),
    )(*operands)

    if (Mp, Np) != (M, N):
        out2d = out2d[:M, :N]
    return out2d.reshape(*lead, N)


def _reference(x, weight, bias):
    out = x.astype(jnp.float32) @ weight.astype(jnp.float32).T
    if bias is not None:
        out = out + bias.astype(jnp.float32)
    return out.astype(x.dtype)


if __name__ == "__main__":
    key = jax.random.PRNGKey(0)

    # Case 1: small bf16 linear with bias (shapes implied by the module).
    B, S, IN, OUT = 2, 8, 32, 64
    kx, kw, kb, kx2, kw2 = jax.random.split(key, 5)
    x = jax.random.normal(kx, (B, S, IN), dtype=jnp.float32).astype(jnp.bfloat16)
    weight = (0.05 * jax.random.normal(kw, (OUT, IN), dtype=jnp.float32)).astype(jnp.bfloat16)
    bias = (0.05 * jax.random.normal(kb, (OUT,), dtype=jnp.float32)).astype(jnp.bfloat16)

    out = jax.block_until_ready(quant_linear_forward(x, weight, bias))
    ref = _reference(x, weight, bias)
    assert out.shape == (B, S, OUT) and out.dtype == x.dtype
    assert jnp.allclose(out.astype(jnp.float32), ref.astype(jnp.float32), atol=2e-2, rtol=2e-2)

    # Case 2: no bias, small tiles forced so the K-accumulation and grid-swap
    # (gn > gm) code paths are exercised.
    IN2, OUT2 = 256, 256
    x2 = jax.random.normal(kx2, (B, S, IN2), dtype=jnp.float32).astype(jnp.bfloat16)
    w2 = (0.05 * jax.random.normal(kw2, (OUT2, IN2), dtype=jnp.float32)).astype(jnp.bfloat16)
    out2 = jax.block_until_ready(
        quant_linear_forward(x2, w2, None, tn_max=128, tk_max=128))
    ref2 = _reference(x2, w2, None)
    assert out2.shape == (B, S, OUT2) and out2.dtype == x2.dtype
    assert jnp.allclose(out2.astype(jnp.float32), ref2.astype(jnp.float32), atol=2e-2, rtol=2e-2)

    print("KERNEL_OK")
</pallas_src>

<mosaic_0001>
module attributes {stable_mosaic.version = 11 : i64} {
  func.func @kernel(%arg0: i32, %arg1: i32, %arg2: i32, %arg3: memref<16x128xbf16, #tpu.memory_space<vmem>>, %arg4: memref<128x128xbf16, #tpu.memory_space<vmem>>, %arg5: memref<1x128xbf16, #tpu.memory_space<vmem>>, %arg6: memref<16x128xbf16, #tpu.memory_space<vmem>>) attributes {dimension_semantics = [#tpu.dimension_semantics<parallel>, #tpu.dimension_semantics<parallel>, #tpu.dimension_semantics<arbitrary>], iteration_bounds = array<i64: 1, 1, 1>, scalar_prefetch = 0 : i64, scratch_operands = 0 : i64, tpu.core_type = #tpu.core_type<tc>, window_params = [{transform_indices = @transform_0, window_bounds = array<i64: 16, 128>}, {transform_indices = @transform_1, window_bounds = array<i64: 128, 128>}, {transform_indices = @transform_2, window_bounds = array<i64: 1, 128>}, {transform_indices = @transform_3, window_bounds = array<i64: 16, 128>}]} {
    %c0 = arith.constant 0 : index
    %c0_0 = arith.constant 0 : index
    %0 = vector.load %arg3[%c0, %c0_0] : memref<16x128xbf16, #tpu.memory_space<vmem>>, vector<16x128xbf16>
    %c0_1 = arith.constant 0 : index
    %c0_2 = arith.constant 0 : index
    %1 = vector.load %arg4[%c0_1, %c0_2] : memref<128x128xbf16, #tpu.memory_space<vmem>>, vector<128x128xbf16>
    %cst = arith.constant dense<0.000000e+00> : vector<16x128xf32>
    %2 = tpu.matmul %0, %1, %cst {dimension_numbers = #tpu.dot_dimension_numbers<[1], [1], [0], [0], [0, 0, 1, 0], [], []>} : vector<16x128xbf16>, vector<128x128xbf16>, vector<16x128xf32> -> vector<16x128xf32>
    %c0_3 = arith.constant 0 : index
    %c0_4 = arith.constant 0 : index
    %3 = vector.load %arg5[%c0_3, %c0_4] : memref<1x128xbf16, #tpu.memory_space<vmem>>, vector<1x128xbf16>
    %4 = arith.extf %3 : vector<1x128xbf16> to vector<1x128xf32>
    %5 = vector.broadcast %4 : vector<1x128xf32> to vector<16x128xf32>
    %6 = arith.addf %2, %5 : vector<16x128xf32>
    %7 = arith.truncf %6 : vector<16x128xf32> to vector<16x128xbf16>
    %c0_5 = arith.constant 0 : index
    %c0_6 = arith.constant 0 : index
    %8 = vector.load %arg6[%c0_5, %c0_6] : memref<16x128xbf16, #tpu.memory_space<vmem>>, vector<16x128xbf16>
    tpu.vector_store %arg6[%c0_5, %c0_6], %7 {strides = array<i32>} : memref<16x128xbf16, #tpu.memory_space<vmem>>, vector<16x128xbf16>,
    return
  }
  func.func @transform_0(%arg0: i32, %arg1: i32, %arg2: i32) -> (i32, i32) {
    %c0_i32 = arith.constant 0 : i32
    return %arg0, %arg2 : i32, i32
  }
  func.func @transform_1(%arg0: i32, %arg1: i32, %arg2: i32) -> (i32, i32) {
    %c0_i32 = arith.constant 0 : i32
    return %arg1, %arg2 : i32, i32
  }
  func.func @transform_2(%arg0: i32, %arg1: i32, %arg2: i32) -> (i32, i32) {
    %c0_i32 = arith.constant 0 : i32
    %c0_i32_0 = arith.constant 0 : i32
    return %c0_i32, %arg1 : i32, i32
  }
  func.func @transform_3(%arg0: i32, %arg1: i32, %arg2: i32) -> (i32, i32) {
    %c0_i32 = arith.constant 0 : i32
    return %arg0, %arg1 : i32, i32
  }
}

</mosaic_0001>

<llo_original>
// kernel: tpu_custom_call.1
$region0: #{tpu_custom_call.1}
  #allocation0 [shape = 'u32[]', space=smem, size = 0x4, offset = 0x4, fixed_abs, tag = 'smem constant byte address 0x4 - core index']
  #allocation1 [shape = 'u32[144,128]{1,0:T(1,128)}', space=vmem, size = 0x12000, scoped, tag = 'internal scratch']
  %s0 = inlined_call_operand.hbm [shape: bf16[16,128], index: 0, kind: input, shape index: {}]
  %s1 = inlined_call_operand.hbm [shape: bf16[128,128], index: 1, kind: input, shape index: {}]
  %s2 = inlined_call_operand.vmem [shape: bf16[1,128], index: 2, kind: input, shape index: {}]
  %s3 = inlined_call_operand.hbm [shape: bf16[16,128], index: 3, kind: output, shape index: {}]
  %s4 = sld [smem:[#allocation0]]
  $region30: #{tpu_custom_call.1} parent=0
    _
  %s6 = ssub.s32 1, %s4
  %s7 = scalar_select 0, %s6, %s4
  $region1: #{tpu_custom_call.1} parent=0
    #allocation2 [shape = 'u8[4096]{0}', space=vmem, size = 0x1000, scoped, tag = 'input window, operand 0, single buffered']
    #allocation3 [shape = 's32[1]{0}', space=sflag, size = 0x4, scoped, tag = 'scoped memory for tpu_custom_call.1']
    #allocation4 [shape = 's32[1]{0}', space=sflag, size = 0x4, scoped, tag = 'scoped memory for tpu_custom_call.1']
    #allocation5 [shape = 'u8[32768]{0}', space=vmem, size = 0x8000, scoped, tag = 'input window, operand 1, single buffered']
    #allocation6 [shape = 's32[1]{0}', space=sflag, size = 0x4, scoped, tag = 'scoped memory for tpu_custom_call.1']
    #allocation7 [shape = 'u8[4096]{0}', space=vmem, size = 0x1000, scoped, tag = 'output window, operand 0, single buffered']
    %8 = vsyncpa [#allocation3], 0
    %9 = vsyncpa [#allocation6], 0
    %10 = vsyncpa [#allocation4], 0
    // Predicated region
    $region2: #{tpu_custom_call.1} parent=1 // pred_check
      _
    $region3: #{tpu_custom_call.1} parent=1 // pred_check_branch
      %12 = sbr.rel (0) target = $region5
    $region4: #{tpu_custom_call.1} parent=1 // pred_region
      %s14 = ssub.s32 128, 128
      %15 = vsyncadd [#allocation3], %s14
      %s16 = sshll.u32 [#allocation2], 4
      %s17 = int_to_ptr.vmem [resolvable:$true] %s16
      %22 = dma.hbm_to_vmem [thread:$0]  %s0, 128, %s17, [#allocation3], 64, 64, 4
    $region5: #{tpu_custom_call.1} parent=1 // pred_fallthru
      _
    // Predicated region
    $region6: #{tpu_custom_call.1} parent=1 // pred_check
      _
    $region7: #{tpu_custom_call.1} parent=1 // pred_check_branch
      %24 = sbr.rel (0) target = $region9
    $region8: #{tpu_custom_call.1} parent=1 // pred_region
      %s26 = ssub.s32 1024, 1024
      %27 = vsyncadd [#allocation6], %s26
      %s28 = sshll.u32 [#allocation5], 4
      %s29 = int_to_ptr.vmem [resolvable:$true] %s28
      %34 = dma.hbm_to_vmem [thread:$0]  %s1, 1024, %s29, [#allocation6], 64, 64, 4
    $region9: #{tpu_custom_call.1} parent=1 // pred_fallthru
      _
    // Predicated region
    $region10: #{tpu_custom_call.1} parent=1 // pred_check
      _
    $region11: #{tpu_custom_call.1} parent=1 // pred_check_branch
      %36 = sbr.rel (0) target = $region13
    $region12: #{tpu_custom_call.1} parent=1 // pred_region
      _
    $region13: #{tpu_custom_call.1} parent=1 // pred_fallthru
      _
    // Predicated region
    $region14: #{tpu_custom_call.1} parent=1 // pred_check
      _
    $region15: #{tpu_custom_call.1} parent=1 // pred_check_branch
      %38 = sbr.rel (0) target = $region17
    $region16: #{tpu_custom_call.1} parent=1 // pred_region
      %39 = dma.done [#allocation3], 128
    $region17: #{tpu_custom_call.1} parent=1 // pred_fallthru
      _
    // Predicated region
    $region18: #{tpu_custom_call.1} parent=1 // pred_check
      _
    $region19: #{tpu_custom_call.1} parent=1 // pred_check_branch
      %41 = sbr.rel (0) target = $region21
    $region20: #{tpu_custom_call.1} parent=1 // pred_region
      %42 = dma.done [#allocation6], 1024
    $region21: #{tpu_custom_call.1} parent=1 // pred_fallthru
      _
    %v44 = vld [vmem:[#allocation2] sm:$0xf]
    %v45 = vld [vmem:[#allocation2 + $0x4] sm:$0xf]
    %v46 = vld [vmem:[#allocation5] sm:$0xf]
    %v47 = vld [vmem:[#allocation5 + $0x4] sm:$0xf]
    %v48 = vld [vmem:[#allocation5 + $0x8] sm:$0xf]
    %v49 = vld [vmem:[#allocation5 + $0xc] sm:$0xf]
    %v50 = vld [vmem:[#allocation5 + $0x10] sm:$0xf]
    %v51 = vld [vmem:[#allocation5 + $0x14] sm:$0xf]
    %v52 = vld [vmem:[#allocation5 + $0x18] sm:$0xf]
    %v53 = vld [vmem:[#allocation5 + $0x1c] sm:$0xf]
    %v54 = vld [vmem:[#allocation5 + $0x20] sm:$0xf]
    %v55 = vld [vmem:[#allocation5 + $0x24] sm:$0xf]
    %v56 = vld [vmem:[#allocation5 + $0x28] sm:$0xf]
    %v57 = vld [vmem:[#allocation5 + $0x2c] sm:$0xf]
    %v58 = vld [vmem:[#allocation5 + $0x30] sm:$0xf]
    %v59 = vld [vmem:[#allocation5 + $0x34] sm:$0xf]
    %v60 = vld [vmem:[#allocation5 + $0x38] sm:$0xf]
    %v61 = vld [vmem:[#allocation5 + $0x3c] sm:$0xf]
    %v62 = vld [vmem:[%s2] sm:$0x1]
    %v63 = vunpack.c.l.bf16 %v62
    %v64 = vlaneseq
    %v65 = vshrl.u32 %v64, 7
    %v66 = vsub.s32 0, %v65
    %v67 = vrot.slane %v63, %v66
    %v70 = vunpack.c.l.b16 %v44
    %v71 = vunpack.c.l.b16 %v45
    %v72 = vpack.c.b16 %v71, %v70
    %v90 = vunpack.c.l.b16 %v46
    %v91 = vunpack.c.l.b16 %v47
    %v92 = vunpack.c.l.b16 %v48
    %v93 = vunpack.c.l.b16 %v49
    %v94 = vunpack.c.l.b16 %v50
    %v95 = vunpack.c.l.b16 %v51
    %v96 = vunpack.c.l.b16 %v52
    %v97 = vunpack.c.l.b16 %v53
    %v98 = vunpack.c.l.b16 %v54
    %v99 = vunpack.c.l.b16 %v55
    %v100 = vunpack.c.l.b16 %v56
    %v101 = vunpack.c.l.b16 %v57
    %v102 = vunpack.c.l.b16 %v58
    %v103 = vunpack.c.l.b16 %v59
    %v104 = vunpack.c.l.b16 %v60
    %v105 = vunpack.c.l.b16 %v61
    %v106 = vpack.c.b16 %v91, %v90
    %v107 = vpack.c.b16 %v93, %v92
    %v108 = vpack.c.b16 %v95, %v94
    %v109 = vpack.c.b16 %v97, %v96
    %v110 = vpack.c.b16 %v99, %v98
    %v111 = vpack.c.b16 %v101, %v100
    %v112 = vpack.c.b16 %v103, %v102
    %v113 = vpack.c.b16 %v105, %v104
    %122 = vmatprep.subr.bf16.mxu0 0
    %123 = vmatpush1.bf16.xpose.msra.mxu0 %v106
    %124 = vmatprep.subr.bf16.mxu0 0
    %125 = vmatpush1.bf16.xpose.msra.mxu0 %v107
    %126 = vmatprep.subr.bf16.mxu0 0
    %127 = vmatpush1.bf16.xpose.msra.mxu0 %v108
    %128 = vmatprep.subr.bf16.mxu0 0
    %129 = vmatpush1.bf16.xpose.msra.mxu0 %v109
    %130 = vmatprep.subr.bf16.mxu0 0
    %131 = vmatpush1.bf16.xpose.msra.mxu0 %v110
    %132 = vmatprep.subr.bf16.mxu0 0
    %133 = vmatpush1.bf16.xpose.msra.mxu0 %v111
    %134 = vmatprep.subr.bf16.mxu0 0
    %135 = vmatpush1.bf16.xpose.msra.mxu0 %v112
    %136 = vmatprep.subr.bf16.mxu0 0
    %137 = vmatpush1.bf16.xpose.msra.mxu0 %v113
    %138 = vmatprep.subr.bf16.mxu0 0
    %139 = vmatpush1.bf16.xpose.msra.mxu0 0
    %140 = vmatprep.subr.bf16.mxu0 0
    %141 = vmatpush1.bf16.xpose.msra.mxu0 0
    %142 = vmatprep.subr.bf16.mxu0 0
    %143 = vmatpush1.bf16.xpose.msra.mxu0 0
    %144 = vmatprep.subr.bf16.mxu0 0
    %145 = vmatpush1.bf16.xpose.msra.mxu0 0
    %146 = vmatprep.subr.bf16.mxu0 0
    %147 = vmatpush1.bf16.xpose.msra.mxu0 0
    %148 = vmatprep.subr.bf16.mxu0 0
    %149 = vmatpush1.bf16.xpose.msra.mxu0 0
    %150 = vmatprep.subr.bf16.mxu0 0
    %151 = vmatpush1.bf16.xpose.msra.mxu0 0
    %152 = vmatprep.subr.bf16.mxu0 0
    %153 = vmatpush1.bf16.xpose.msra.mxu0 0
    %154 = vmatprep.mubr.bf16.mxu0 0
    %155 = vmatmul.mubr.bf16.gmra.mrb[0].mxu0 %v72
    %v156 = vpop.f32.mrb[0].mxu0
    %v157 = vadd.f32 %v67, %v156
    %v158 = vpop.f32.mrb[0].mxu0
    %v159 = vpop.f32.mrb[0].mxu0
    %v160 = vadd.f32 %v67, %v159
    %v161 = vpop.f32.mrb[0].mxu0
    %162 = vdwg.mxu0
    %v163 = vpack.c.bf16 %v160, %v157
    %v165 = vunpack.c.l.b16 %v163
    %v166 = vunpack.c.h.b16 %v163
    %v167 = vpack.c.b16 %v165, %v165
    %v168 = vpack.c.b16 %v166, %v166
    %171 = vst [vmem:[#allocation7] sm:$0xf] %v167
    %172 = vst [vmem:[#allocation7 + $0x4] sm:$0xf] %v168
    // Predicated region
    $region22: #{tpu_custom_call.1} parent=1 // pred_check
      _
    $region23: #{tpu_custom_call.1} parent=1 // pred_check_branch
      %174 = sbr.rel (0) target = $region25
    $region24: #{tpu_custom_call.1} parent=1 // pred_region
      %s176 = ssub.s32 128, 128
      %177 = vsyncadd [#allocation4], %s176
      %s178 = sshll.u32 [#allocation7], 4
      %s179 = int_to_ptr.vmem [resolvable:$true] %s178
      %184 = dma.vmem_to_hbm [thread:$0]  %s179, 128, %s3, [#allocation4], 64, 64, 4
    $region25: #{tpu_custom_call.1} parent=1 // pred_fallthru
      _
    // Predicated region
    $region26: #{tpu_custom_call.1} parent=1 // pred_check
      _
    $region27: #{tpu_custom_call.1} parent=1 // pred_check_branch
      %186 = sbr.rel (0) target = $region29
    $region28: #{tpu_custom_call.1} parent=1 // pred_region
      %187 = dma.done [#allocation4], 128
    $region29: #{tpu_custom_call.1} parent=1 // pred_fallthru
      _
    %188 = vsyncpa [#allocation3], 1
    %189 = vsyncpa [#allocation6], 1
    %190 = vsyncpa [#allocation4], 1

</llo_original>
